<compile_context>
chip_gen: v7x
topology: tpu7x:2x2x1
jax: 0.10.0
libtpu: 0.0.40
codegen_flags: <defaults>
</compile_context>

<pallas_src>
import jax
import jax.numpy as jnp
from jax import lax
from jax.experimental import pallas as pl
from jax.experimental.pallas import tpu as pltpu

POOL_SIZE = 3  # kernel=3, stride=1, pad = pool_size // 2 = 1
PAD = POOL_SIZE // 2


def _pooling_kernel(inv_ref, x_ref, o_ref, rw_ref, acc_ref):
    """Block layout: (BT, H, W, CT) -- C on lanes, W on sublanes."""
    x = x_ref[...]
    xf = x.astype(jnp.float32)
    H = xf.shape[1]
    W = xf.shape[2]

    # ---- 1x3 sum along W (sublane axis): roll + edge-mask select ----------
    # up[w]   = x[w-1] (0 at w == 0)      -> roll by +1, mask wrapped row
    # down[w] = x[w+1] (0 at w == W-1)    -> roll by W-1 (== -1 mod W), mask
    w_idx = lax.broadcasted_iota(jnp.int32, xf.shape, 2)
    up = jnp.where(w_idx == 0, 0.0, pltpu.roll(xf, 1, axis=2))
    down = jnp.where(w_idx == W - 1, 0.0, pltpu.roll(xf, W - 1, axis=2))
    rw_ref[...] = xf + up + down

    # ---- 3x1 sum along H (leading dim): slice adds, no padded temporaries --
    acc_ref[...] = rw_ref[...]
    if H > 1:
        acc_ref[:, : H - 1, :, :] = (
            acc_ref[:, : H - 1, :, :] + rw_ref[:, 1:, :, :]
        )
        acc_ref[:, 1:, :, :] = (
            acc_ref[:, 1:, :, :] + rw_ref[:, : H - 1, :, :]
        )

    # ---- scale by 1/count (count_include_pad=False) and subtract x ---------
    inv = inv_ref[...][None]  # (1, H, W, 1): broadcasts over batch and lanes
    o_ref[...] = (acc_ref[...] * inv - xf).astype(o_ref.dtype)


def _choose_tiles(B, C, H, W, target_f32_bytes):
    """Pick (BT, CT): CT lane-dense (multiple of 128 when possible), f32 block
    near `target_f32_bytes`, and >= 2 grid steps when the shape allows."""
    plane_f32 = H * W * 4

    if C % 128 == 0:
        ct = 128
        t = 256
        while t <= C:
            if C % t == 0 and plane_f32 * t <= target_f32_bytes:
                ct = t
            t += 128
    else:
        ct = C  # narrow / ragged channel dim: take it whole (full lane extent)

    bt = 1
    for d in range(1, B + 1):
        if B % d == 0 and d * plane_f32 * ct <= target_f32_bytes:
            bt = d

    def steps(bt_, ct_):
        return (B // bt_) * (C // ct_)

    # Keep at least 2 parallel grid steps (v7x megacore) when possible.
    while steps(bt, ct) < 2 and bt > 1:
        bt = max(d for d in range(1, bt) if B % d == 0)
    if steps(bt, ct) < 2 and C % 128 == 0 and ct > 128:
        cands = [t for t in range(128, ct, 128) if C % t == 0]
        if cands:
            ct = max(cands)
    return bt, ct


def pooling_nhwc(x_nhwc, *, target_f32_bytes=2 * 1024 * 1024):
    """x_nhwc: (B, H, W, C) -> AvgPool3x3(stride 1, pad 1, no-pad-count)(x) - x."""
    B, H, W, C = x_nhwc.shape
    dtype = x_nhwc.dtype
    itemsize = jnp.dtype(dtype).itemsize

    # Lane-dense channels: pad C to a multiple of 128 only when it is wide but
    # ragged (e.g. 320 -> 384); extra channels are zeros and sliced off below.
    C_pad = C
    if C > 128 and C % 128 != 0:
        C_pad = ((C + 127) // 128) * 128
        x_nhwc = jnp.pad(x_nhwc, ((0, 0), (0, 0), (0, 0), (0, C_pad - C)))

    BT, CT = _choose_tiles(B, C_pad, H, W, target_f32_bytes)

    # Reciprocal of the valid-window element count, shaped (H, W, 1) so W sits
    # on sublanes like the data block (lane-splat multiply, no relayout).
    i = jnp.arange(H)
    j = jnp.arange(W)
    rows = jnp.minimum(i + PAD, H - 1) - jnp.maximum(i - PAD, 0) + 1
    cols = jnp.minimum(j + PAD, W - 1) - jnp.maximum(j - PAD, 0) + 1
    inv_cnt = (1.0 / (rows[:, None] * cols[None, :]).astype(jnp.float32))
    inv_cnt = inv_cnt.reshape(H, W, 1)

    io_block = BT * H * W * CT * itemsize
    f32_block = BT * H * W * CT * 4
    vmem_limit = int(
        min(32 * 1024 * 1024,
            max(4 * 1024 * 1024, 4 * io_block + 6 * f32_block + (1 << 20)))
    )

    nelems = B * H * W * C_pad
    cost = pl.CostEstimate(
        flops=8 * nelems,  # 6 adds + 1 mul + 1 sub per element
        transcendentals=0,
        bytes_accessed=2 * nelems * itemsize + H * W * 4,
    )

    out = pl.pallas_call(
        _pooling_kernel,
        out_shape=jax.ShapeDtypeStruct((B, H, W, C_pad), dtype),
        grid_spec=pltpu.PrefetchScalarGridSpec(
            num_scalar_prefetch=0,
            grid=(B // BT, C_pad // CT),
            in_specs=[
                pl.BlockSpec((H, W, 1), lambda b, c: (0, 0, 0)),            # inv_cnt
                pl.BlockSpec((BT, H, W, CT), lambda b, c: (b, 0, 0, c)),     # x
            ],
            out_specs=pl.BlockSpec((BT, H, W, CT), lambda b, c: (b, 0, 0, c)),
            scratch_shapes=[
                pltpu.VMEM((BT, H, W, CT), jnp.float32),  # rw (1x3 row sums)
                pltpu.VMEM((BT, H, W, CT), jnp.float32),  # acc (3x3 box sums)
            ],
        ),
        compiler_params=pltpu.CompilerParams(
            dimension_semantics=("parallel", "parallel"),
            vmem_limit_bytes=vmem_limit,
        ),
        cost_estimate=cost,
    )(inv_cnt, x_nhwc)

    if C_pad != C:
        out = out[..., :C]
    return out


def pooling(x):
    """PyTorch-NCHW interface: x (B, C, H, W) -> pool(x) - x.

    TODO(synk): in the full PoolFormer model keep activations NHWC end-to-end
    and call `pooling_nhwc` directly; these transposes are standalone-only
    layout plumbing (each is a full HBM read+write).
    """
    x_nhwc = jnp.transpose(x, (0, 2, 3, 1))
    out_nhwc = pooling_nhwc(x_nhwc)
    return jnp.transpose(out_nhwc, (0, 3, 1, 2))


def _reference(x):
    """Pure-JAX reference: AvgPool2d(3,1,1,count_include_pad=False)(x) - x (NCHW)."""
    B, C, H, W = x.shape
    xp = jnp.pad(x, ((0, 0), (0, 0), (PAD, PAD), (PAD, PAD)))
    acc = jnp.zeros_like(x)
    for dh in range(POOL_SIZE):
        for dw in range(POOL_SIZE):
            acc = acc + xp[:, :, dh:dh + H, dw:dw + W]
    i = jnp.arange(H)
    j = jnp.arange(W)
    rows = jnp.minimum(i + PAD, H - 1) - jnp.maximum(i - PAD, 0) + 1
    cols = jnp.minimum(j + PAD, W - 1) - jnp.maximum(j - PAD, 0) + 1
    cnt = (rows[:, None] * cols[None, :]).astype(x.dtype)
    return acc / cnt[None, None] - x


if __name__ == "__main__":
    key = jax.random.PRNGKey(0)

    # Small shape matching the original harness (NCHW, like PyTorch).
    x = jax.random.normal(key, (2, 4, 16, 16), dtype=jnp.float32)
    out = jax.block_until_ready(pooling(x))
    ref = _reference(x)
    assert out.shape == x.shape and out.dtype == x.dtype
    assert jnp.allclose(out, ref, atol=1e-5, rtol=1e-5), "mismatch vs reference"

    # Second small check exercising a lane-dense (C=128) channel dim.
    x2 = jax.random.normal(jax.random.PRNGKey(1), (2, 128, 8, 8), dtype=jnp.float32)
    out2 = jax.block_until_ready(pooling(x2))
    ref2 = _reference(x2)
    assert jnp.allclose(out2, ref2, atol=1e-5, rtol=1e-5), "mismatch vs reference (C=128)"

    print("KERNEL_OK")
</pallas_src>

<mosaic_0001>
module attributes {stable_mosaic.version = 11 : i64} {
  func.func @_pooling_kernel(%arg0: i32, %arg1: i32, %arg2: memref<16x16x1xf32, #tpu.memory_space<vmem>>, %arg3: memref<1x16x16x4xf32, #tpu.memory_space<vmem>>, %arg4: memref<1x16x16x4xf32, #tpu.memory_space<vmem>>, %arg5: memref<1x16x16x4xf32, #tpu.memory_space<vmem>>, %arg6: memref<1x16x16x4xf32, #tpu.memory_space<vmem>>) attributes {dimension_semantics = [#tpu.dimension_semantics<parallel>, #tpu.dimension_semantics<parallel>], iteration_bounds = array<i64: 2, 1>, scalar_prefetch = 0 : i64, scratch_operands = 2 : i64, tpu.core_type = #tpu.core_type<tc>, window_params = [{pipeline_mode = #tpu.pipeline_mode<synchronous>, transform_indices = @transform_0, window_bounds = array<i64: 16, 16, 1>}, {transform_indices = @transform_1, window_bounds = array<i64: 1, 16, 16, 4>}, {transform_indices = @transform_2, window_bounds = array<i64: 1, 16, 16, 4>}]} {
    %c0 = arith.constant 0 : index
    %c0_0 = arith.constant 0 : index
    %c0_1 = arith.constant 0 : index
    %c0_2 = arith.constant 0 : index
    %0 = vector.load %arg3[%c0, %c0_0, %c0_1, %c0_2] : memref<1x16x16x4xf32, #tpu.memory_space<vmem>>, vector<1x16x16x4xf32>
    %1 = tpu.iota {dimensions = array<i32: 2>} : vector<1x16x16x4xi32>
    %c0_i32 = arith.constant 0 : i32
    %2 = vector.broadcast %c0_i32 : i32 to vector<1x16x16x4xi32>
    %3 = arith.cmpi eq, %1, %2 : vector<1x16x16x4xi32>
    %c1_i32 = arith.constant 1 : i32
    %4 = tpu.dynamic_rotate %0 by %c1_i32 dim 2 : vector<1x16x16x4xf32>, i32 -> vector<1x16x16x4xf32>
    %cst = arith.constant 0.000000e+00 : f32
    %5 = vector.broadcast %cst : f32 to vector<1x16x16x4xf32>
    %6 = arith.select %3, %5, %4 : vector<1x16x16x4xi1>, vector<1x16x16x4xf32>
    %c15_i32 = arith.constant 15 : i32
    %7 = vector.broadcast %c15_i32 : i32 to vector<1x16x16x4xi32>
    %8 = arith.cmpi eq, %1, %7 : vector<1x16x16x4xi32>
    %c15_i32_3 = arith.constant 15 : i32
    %9 = tpu.dynamic_rotate %0 by %c15_i32_3 dim 2 : vector<1x16x16x4xf32>, i32 -> vector<1x16x16x4xf32>
    %cst_4 = arith.constant 0.000000e+00 : f32
    %10 = vector.broadcast %cst_4 : f32 to vector<1x16x16x4xf32>
    %11 = arith.select %8, %10, %9 : vector<1x16x16x4xi1>, vector<1x16x16x4xf32>
    %12 = arith.addf %0, %6 : vector<1x16x16x4xf32>
    %13 = arith.addf %12, %11 : vector<1x16x16x4xf32>
    %c0_5 = arith.constant 0 : index
    %c0_6 = arith.constant 0 : index
    %c0_7 = arith.constant 0 : index
    %c0_8 = arith.constant 0 : index
    %14 = vector.load %arg5[%c0_5, %c0_6, %c0_7, %c0_8] : memref<1x16x16x4xf32, #tpu.memory_space<vmem>>, vector<1x16x16x4xf32>
    tpu.vector_store %arg5[%c0_5, %c0_6, %c0_7, %c0_8], %13 {strides = array<i32>} : memref<1x16x16x4xf32, #tpu.memory_space<vmem>>, vector<1x16x16x4xf32>,
    %c0_9 = arith.constant 0 : index
    %c0_10 = arith.constant 0 : index
    %c0_11 = arith.constant 0 : index
    %c0_12 = arith.constant 0 : index
    %15 = vector.load %arg5[%c0_9, %c0_10, %c0_11, %c0_12] : memref<1x16x16x4xf32, #tpu.memory_space<vmem>>, vector<1x16x16x4xf32>
    %c0_13 = arith.constant 0 : index
    %c0_14 = arith.constant 0 : index
    %c0_15 = arith.constant 0 : index
    %c0_16 = arith.constant 0 : index
    %16 = vector.load %arg6[%c0_13, %c0_14, %c0_15, %c0_16] : memref<1x16x16x4xf32, #tpu.memory_space<vmem>>, vector<1x16x16x4xf32>
    tpu.vector_store %arg6[%c0_13, %c0_14, %c0_15, %c0_16], %15 {strides = array<i32>} : memref<1x16x16x4xf32, #tpu.memory_space<vmem>>, vector<1x16x16x4xf32>,
    %c0_17 = arith.constant 0 : index
    %c0_18 = arith.constant 0 : index
    %c0_19 = arith.constant 0 : index
    %c0_20 = arith.constant 0 : index
    %17 = vector.load %arg6[%c0_17, %c0_18, %c0_19, %c0_20] : memref<1x16x16x4xf32, #tpu.memory_space<vmem>>, vector<1x15x16x4xf32>
    %c0_21 = arith.constant 0 : index
    %c1 = arith.constant 1 : index
    %c0_22 = arith.constant 0 : index
    %c0_23 = arith.constant 0 : index
    %18 = vector.load %arg5[%c0_21, %c1, %c0_22, %c0_23] : memref<1x16x16x4xf32, #tpu.memory_space<vmem>>, vector<1x15x16x4xf32>
    %19 = arith.addf %17, %18 : vector<1x15x16x4xf32>
    %c0_24 = arith.constant 0 : index
    %c0_25 = arith.constant 0 : index
    %c0_26 = arith.constant 0 : index
    %c0_27 = arith.constant 0 : index
    %20 = vector.load %arg6[%c0_24, %c0_25, %c0_26, %c0_27] : memref<1x16x16x4xf32, #tpu.memory_space<vmem>>, vector<1x15x16x4xf32>
    tpu.vector_store %arg6[%c0_24, %c0_25, %c0_26, %c0_27], %19 {strides = array<i32>} : memref<1x16x16x4xf32, #tpu.memory_space<vmem>>, vector<1x15x16x4xf32>,
    %c0_28 = arith.constant 0 : index
    %c1_29 = arith.constant 1 : index
    %c0_30 = arith.constant 0 : index
    %c0_31 = arith.constant 0 : index
    %21 = vector.load %arg6[%c0_28, %c1_29, %c0_30, %c0_31] : memref<1x16x16x4xf32, #tpu.memory_space<vmem>>, vector<1x15x16x4xf32>
    %c0_32 = arith.constant 0 : index
    %c0_33 = arith.constant 0 : index
    %c0_34 = arith.constant 0 : index
    %c0_35 = arith.constant 0 : index
    %22 = vector.load %arg5[%c0_32, %c0_33, %c0_34, %c0_35] : memref<1x16x16x4xf32, #tpu.memory_space<vmem>>, vector<1x15x16x4xf32>
    %23 = arith.addf %21, %22 : vector<1x15x16x4xf32>
    %c0_36 = arith.constant 0 : index
    %c1_37 = arith.constant 1 : index
    %c0_38 = arith.constant 0 : index
    %c0_39 = arith.constant 0 : index
    %24 = vector.load %arg6[%c0_36, %c1_37, %c0_38, %c0_39] : memref<1x16x16x4xf32, #tpu.memory_space<vmem>>, vector<1x15x16x4xf32>
    tpu.vector_store %arg6[%c0_36, %c1_37, %c0_38, %c0_39], %23 {strides = array<i32>} : memref<1x16x16x4xf32, #tpu.memory_space<vmem>>, vector<1x15x16x4xf32>,
    %c0_40 = arith.constant 0 : index
    %c0_41 = arith.constant 0 : index
    %c0_42 = arith.constant 0 : index
    %25 = vector.load %arg2[%c0_40, %c0_41, %c0_42] : memref<16x16x1xf32, #tpu.memory_space<vmem>>, vector<16x16x1xf32>
    %26 = vector.shape_cast %25 : vector<16x16x1xf32> to vector<1x16x16x1xf32>
    %c0_43 = arith.constant 0 : index
    %c0_44 = arith.constant 0 : index
    %c0_45 = arith.constant 0 : index
    %c0_46 = arith.constant 0 : index
    %27 = vector.load %arg6[%c0_43, %c0_44, %c0_45, %c0_46] : memref<1x16x16x4xf32, #tpu.memory_space<vmem>>, vector<1x16x16x4xf32>
    %28 = vector.broadcast %26 : vector<1x16x16x1xf32> to vector<1x16x16x4xf32>
    %29 = arith.mulf %27, %28 : vector<1x16x16x4xf32>
    %30 = arith.subf %29, %0 : vector<1x16x16x4xf32>
    %c0_47 = arith.constant 0 : index
    %c0_48 = arith.constant 0 : index
    %c0_49 = arith.constant 0 : index
    %c0_50 = arith.constant 0 : index
    %31 = vector.load %arg4[%c0_47, %c0_48, %c0_49, %c0_50] : memref<1x16x16x4xf32, #tpu.memory_space<vmem>>, vector<1x16x16x4xf32>
    tpu.vector_store %arg4[%c0_47, %c0_48, %c0_49, %c0_50], %30 {strides = array<i32>} : memref<1x16x16x4xf32, #tpu.memory_space<vmem>>, vector<1x16x16x4xf32>,
    return
  }
  func.func @transform_0(%arg0: i32, %arg1: i32) -> (i32, i32, i32) {
    %c0_i32 = arith.constant 0 : i32
    %c0_i32_0 = arith.constant 0 : i32
    %c0_i32_1 = arith.constant 0 : i32
    %c0_i32_2 = arith.constant 0 : i32
    return %c0_i32, %c0_i32_0, %c0_i32_1 : i32, i32, i32
  }
  func.func @transform_1(%arg0: i32, %arg1: i32) -> (i32, i32, i32, i32) {
    %c0_i32 = arith.constant 0 : i32
    %c0_i32_0 = arith.constant 0 : i32
    %c0_i32_1 = arith.constant 0 : i32
    return %arg0, %c0_i32, %c0_i32_0, %arg1 : i32, i32, i32, i32
  }
  func.func @transform_2(%arg0: i32, %arg1: i32) -> (i32, i32, i32, i32) {
    %c0_i32 = arith.constant 0 : i32
    %c0_i32_0 = arith.constant 0 : i32
    %c0_i32_1 = arith.constant 0 : i32
    return %arg0, %c0_i32, %c0_i32_0, %arg1 : i32, i32, i32, i32
  }
}

</mosaic_0001>

<llo_original>
// kernel: tpu_custom_call.1
$region0: #{tpu_custom_call.1}
  #allocation0 [shape = 'u32[]', space=smem, size = 0x4, offset = 0x4, fixed_abs, tag = 'smem constant byte address 0x4 - core index']
  #allocation1 [shape = 'u32[144,128]{1,0:T(1,128)}', space=vmem, size = 0x12000, scoped, tag = 'internal scratch']
  #allocation2 [shape = 'f32[1,16,16,4]{3,2,1,0:T(8,128)}', space=vmem, size = 0x20000, scoped, tag = 'scratch operand']
  #allocation3 [shape = 'f32[1,16,16,4]{3,2,1,0:T(8,128)}', space=vmem, size = 0x20000, scoped, tag = 'scratch operand']
  %s0 = inlined_call_operand.vmem [shape: f32[16,16,1], index: 0, kind: input, shape index: {}]
  %s1 = inlined_call_operand.vmem [shape: f32[2,16,16,4], index: 1, kind: input, shape index: {}]
  %s2 = inlined_call_operand.vmem [shape: f32[2,16,16,4], index: 2, kind: output, shape index: {}]
  %s3 = sld [smem:[#allocation0]]
  $region41: #{tpu_custom_call.1} parent=0
    _
  %s5 = ssub.s32 1, %s3
  %s6 = scalar_select 0, %s5, %s3
  loop: start=0, step=1, limit=4
  $region2: #{tpu_custom_call.1} parent=0 // loop_pre_header
    _
  $region3: #{tpu_custom_call.1} parent=0 // loop_header
    %s8 = sphi 0, %s12
    %p9 = scmp.ge.s32.totalorder %s8, 4
    %s15 = sphi 0, %s27
    %s16 = sphi 0, %s23
    %s17 = sphi 0, %s15
    %s18 = sphi 0, %s16
    %s19 = sphi 0, %s17
    %s20 = sphi 0, %s18
    %s28 = sphi 0, %s28
    %s30 = sphi 0, %s28
    %s31 = sphi 0, %s30
    %s45 = sphi 0, %s31
    %s53 = sphi 0, %s55
    %s56 = sphi 0, %s53
    %s57 = sphi 0, %s56
    %s73 = sphi 0, %s57
    %s81 = sphi 0, %s83
    %s84 = sphi 0, %s81
    %s85 = sphi 0, %s84
    %s101 = sphi 0, %s85
  $region4: #{tpu_custom_call.1} parent=0 // loop_header_branch
    %11 = sbr.rel (%p9) target = $region8
  $region5: #{tpu_custom_call.1} parent=0 // loop_body
    %s13 = ssub.s32 %s8, 1
    %s14 = ssub.s32 %s8, 2
    %s21 = sadd.s32 1, %s16
    %p22 = scmp.ge.s32.totalorder %s21, 1
    %s23 = scalar_select %p22, 0, %s21
    %s24 = sadd.s32 1, %s15
    %s25 = scalar_select %p22, %s24, %s15
    %p26 = scmp.ge.s32.totalorder %s25, 2
    %s27 = scalar_select %p26, 0, %s25
    %s29 = sadd.s32 %s28, 1
    %p32 = scmp.eq.s32.totalorder %s8, 1
    %p33 = scmp.ne.s32.totalorder %s28, %s30
    %p34 = scmp.eq.s32.totalorder %s8, 0
    %p35 = por %p33, %p34
    %p36 = scmp.ne.s32.totalorder %s28, %s30
    %p37 = scmp.eq.s32.totalorder %s13, 1
    %p38 = por %p36, %p37
    %p39 = scmp.ne.s32.totalorder %s30, %s31
    %p40 = scmp.eq.s32.totalorder %s13, 0
    %p41 = por %p39, %p40
    %p42 = scmp.ne.s32.totalorder %s30, %s31
    %p43 = scmp.eq.s32.totalorder %s14, 1
    %p44 = por %p42, %p43
    %p46 = scmp.ne.s32.totalorder %s31, %s45
    %p47 = scmp.eq.s32.totalorder %s14, 0
    %p48 = por %p46, %p47
    %s49 = ssub.s32 %s15, %s27
    %s50 = ssub.s32 %s16, %s23
    %s51 = sor.u32 %s49, %s50
    %p52 = scmp.eq.s32.totalorder %s51, 0
    %s54 = sadd.s32 %s53, 1
    %s55 = scalar_select %p52, %s53, %s54
    %p58 = pneg %p52
    %p59 = scmp.eq.s32.totalorder %s8, 1
    %p60 = por %p58, %p59
    %p61 = scmp.ne.s32.totalorder %s53, %s56
    %p62 = scmp.eq.s32.totalorder %s8, 0
    %p63 = por %p61, %p62
    %p64 = scmp.ne.s32.totalorder %s53, %s56
    %p65 = scmp.eq.s32.totalorder %s13, 1
    %p66 = por %p64, %p65
    %p67 = scmp.ne.s32.totalorder %s56, %s57
    %p68 = scmp.eq.s32.totalorder %s13, 0
    %p69 = por %p67, %p68
    %p70 = scmp.ne.s32.totalorder %s56, %s57
    %p71 = scmp.eq.s32.totalorder %s14, 1
    %p72 = por %p70, %p71
    %p74 = scmp.ne.s32.totalorder %s57, %s73
    %p75 = scmp.eq.s32.totalorder %s14, 0
    %p76 = por %p74, %p75
    %s77 = ssub.s32 %s15, %s27
    %s78 = ssub.s32 %s16, %s23
    %s79 = sor.u32 %s77, %s78
    %p80 = scmp.eq.s32.totalorder %s79, 0
    %s82 = sadd.s32 %s81, 1
    %s83 = scalar_select %p80, %s81, %s82
    %p86 = pneg %p80
    %p87 = scmp.eq.s32.totalorder %s8, 1
    %p88 = por %p86, %p87
    %p89 = scmp.ne.s32.totalorder %s81, %s84
    %p90 = scmp.eq.s32.totalorder %s8, 0
    %p91 = por %p89, %p90
    %p92 = scmp.ne.s32.totalorder %s81, %s84
    %p93 = scmp.eq.s32.totalorder %s13, 1
    %p94 = por %p92, %p93
    %p95 = scmp.ne.s32.totalorder %s84, %s85
    %p96 = scmp.eq.s32.totalorder %s13, 0
    %p97 = por %p95, %p96
    %p98 = scmp.ne.s32.totalorder %s84, %s85
    %p99 = scmp.eq.s32.totalorder %s14, 1
    %p100 = por %p98, %p99
    %p102 = scmp.ne.s32.totalorder %s85, %s101
    %p103 = scmp.eq.s32.totalorder %s14, 0
    %p104 = por %p102, %p103
    %p105 = scmp.le.s32.totalorder 1, %s8
    %p106 = scmp.lt.s32.totalorder %s8, 3
    %p107 = pnand %p105, %p106
    %p108 = pneg %p107
    // Predicated region
    $region9: #{tpu_custom_call.1} parent=5 // pred_check
      _
    $region10: #{tpu_custom_call.1} parent=5 // pred_check_branch
      %110 = sbr.rel (%p107) target = $region12
    $region11: #{tpu_custom_call.1} parent=5 // pred_region
      %s111 = ssub.s32 %s8, 1
      // Predicated region
      $region13: #{tpu_custom_call.1} parent=11 // pred_check
        %p112 = pneg %p41
      $region14: #{tpu_custom_call.1} parent=11 // pred_check_branch
        %114 = sbr.rel (%p112) target = $region16
      $region15: #{tpu_custom_call.1} parent=11 // pred_region
        _
      $region16: #{tpu_custom_call.1} parent=11 // pred_fallthru
        _
    $region12: #{tpu_custom_call.1} parent=5 // pred_fallthru
      _
    %p115 = scmp.lt.s32.totalorder %s8, 2
    // Predicated region
    $region17: #{tpu_custom_call.1} parent=5 // pred_check
      %p116 = pneg %p115
    $region18: #{tpu_custom_call.1} parent=5 // pred_check_branch
      %118 = sbr.rel (%p116) target = $region20
    $region19: #{tpu_custom_call.1} parent=5 // pred_region
      // Predicated region
      $region21: #{tpu_custom_call.1} parent=19 // pred_check
        %p119 = pneg %p63
      $region22: #{tpu_custom_call.1} parent=19 // pred_check_branch
        %121 = sbr.rel (%p119) target = $region24
      $region23: #{tpu_custom_call.1} parent=19 // pred_region
        %p122 = scmp.lt.s32.totalorder %s15, 1
        %s123 = scalar_select %p122, %s15, 1
        %p124 = scmp.lt.s32.totalorder %s16, 0
        %s125 = scalar_select %p124, %s16, 0
        %s126 = smul.addr %s123, 32
        %s127 = sadd.s32 %s125, %s126
        %s128 = smul.addr %s127, 8
        %s129 = scalar_lea.vmem %s1, %s128
      $region24: #{tpu_custom_call.1} parent=19 // pred_fallthru
        _
    $region20: #{tpu_custom_call.1} parent=5 // pred_fallthru
      _
    %p130 = scmp.le.s32.totalorder 1, %s8
    %p131 = scmp.lt.s32.totalorder %s8, 3
    %p132 = pnand %p130, %p131
    %p133 = pneg %p132
    // Predicated region
    $region25: #{tpu_custom_call.1} parent=5 // pred_check
      _
    $region26: #{tpu_custom_call.1} parent=5 // pred_check_branch
      %135 = sbr.rel (%p132) target = $region28
    $region27: #{tpu_custom_call.1} parent=5 // pred_region
      %s136 = ssub.s32 %s8, 1
      %p137 = pneg %p41
      %p138 = pneg %p38
      %p139 = scmp.lt.s32.totalorder %s17, 1
      %s140 = scalar_select %p139, %s17, 1
      %p141 = scmp.lt.s32.totalorder %s18, 0
      %s142 = scalar_select %p141, %s18, 0
      %s143 = smul.addr %s140, 32
      %s144 = sadd.s32 %s142, %s143
      %s145 = smul.addr %s144, 8
      %s146 = scalar_lea.vmem %s1, %s145
      %p147 = pneg %p69
      %p148 = pneg %p66
      %p149 = pneg %p97
      %p150 = pneg %p94
      %p151 = scmp.lt.s32.totalorder %s17, 1
      %s152 = scalar_select %p151, %s17, 1
      %p153 = scmp.lt.s32.totalorder %s18, 0
      %s154 = scalar_select %p153, %s18, 0
      %s155 = smul.addr %s152, 32
      %s156 = sadd.s32 %s154, %s155
      %s157 = smul.addr %s156, 8
      %s158 = scalar_lea.vmem %s2, %s157
      %p159 = scmp.lt.s32.totalorder %s17, 1
      %s160 = scalar_select %p159, %s17, 1
      %p161 = scmp.lt.s32.totalorder %s18, 0
      %s162 = scalar_select %p161, %s18, 0
      %s163 = smul.addr %s160, 32
      %s164 = sadd.s32 %s162, %s163
      %s165 = smul.addr %s164, 8
      %s166 = scalar_lea.vmem %s1, %s165
      %p167 = scmp.lt.s32.totalorder %s17, 1
      %s168 = scalar_select %p167, %s17, 1
      %p169 = scmp.lt.s32.totalorder %s18, 0
      %s170 = scalar_select %p169, %s18, 0
      %s171 = smul.addr %s168, 32
      %s172 = sadd.s32 %s170, %s171
      %s173 = smul.addr %s172, 8
      %s174 = scalar_lea.vmem %s2, %s173
      %v175 = vld [vmem:[%s166] sm:$0xff]
      %v176 = vld [vmem:[%s166 + $0x8] sm:$0xff]
      %v177 = vld [vmem:[%s166 + $0x10] sm:$0xff]
      %v178 = vld [vmem:[%s166 + $0x18] sm:$0xff]
      %v179 = vld [vmem:[%s166 + $0x20] sm:$0xff]
      %v180 = vld [vmem:[%s166 + $0x28] sm:$0xff]
      %v181 = vld [vmem:[%s166 + $0x30] sm:$0xff]
      %v182 = vld [vmem:[%s166 + $0x38] sm:$0xff]
      %v183 = vld [vmem:[%s166 + $0x40] sm:$0xff]
      %v184 = vld [vmem:[%s166 + $0x48] sm:$0xff]
      %v185 = vld [vmem:[%s166 + $0x50] sm:$0xff]
      %v186 = vld [vmem:[%s166 + $0x58] sm:$0xff]
      %v187 = vld [vmem:[%s166 + $0x60] sm:$0xff]
      %v188 = vld [vmem:[%s166 + $0x68] sm:$0xff]
      %v189 = vld [vmem:[%s166 + $0x70] sm:$0xff]
      %v190 = vld [vmem:[%s166 + $0x78] sm:$0xff]
      %v191 = vld [vmem:[%s166 + $0x80] sm:$0xff]
      %v192 = vld [vmem:[%s166 + $0x88] sm:$0xff]
      %v193 = vld [vmem:[%s166 + $0x90] sm:$0xff]
      %v194 = vld [vmem:[%s166 + $0x98] sm:$0xff]
      %v195 = vld [vmem:[%s166 + $0xa0] sm:$0xff]
      %v196 = vld [vmem:[%s166 + $0xa8] sm:$0xff]
      %v197 = vld [vmem:[%s166 + $0xb0] sm:$0xff]
      %v198 = vld [vmem:[%s166 + $0xb8] sm:$0xff]
      %v199 = vld [vmem:[%s166 + $0xc0] sm:$0xff]
      %v200 = vld [vmem:[%s166 + $0xc8] sm:$0xff]
      %v201 = vld [vmem:[%s166 + $0xd0] sm:$0xff]
      %v202 = vld [vmem:[%s166 + $0xd8] sm:$0xff]
      %v203 = vld [vmem:[%s166 + $0xe0] sm:$0xff]
      %v204 = vld [vmem:[%s166 + $0xe8] sm:$0xff]
      %v205 = vld [vmem:[%s166 + $0xf0] sm:$0xff]
      %v206 = vld [vmem:[%s166 + $0xf8] sm:$0xff]
      %v207 = vlaneseq
      %v208 = vshrl.u32 %v207, 7
      %v209 = vadd.s32 %v208, 8
      %vm210 = vcmp.eq.s32.totalorder %v208, 0
      %vm211 = vcmp.eq.s32.totalorder %v209, 0
      %v212 = vrot.slane %v175, 7
      %v213 = vrot.slane %v177, 7
      %v214 = vrot.slane %v179, 7
      %v215 = vrot.slane %v181, 7
      %v216 = vrot.slane %v183, 7
      %v217 = vrot.slane %v185, 7
      %v218 = vrot.slane %v187, 7
      %v219 = vrot.slane %v189, 7
      %v220 = vrot.slane %v191, 7
      %v221 = vrot.slane %v193, 7
      %v222 = vrot.slane %v195, 7
      %v223 = vrot.slane %v197, 7
      %v224 = vrot.slane %v199, 7
      %v225 = vrot.slane %v201, 7
      %v226 = vrot.slane %v203, 7
      %v227 = vrot.slane %v205, 7
      %v228 = vrot.slane %v176, 7
      %v229 = vrot.slane %v178, 7
      %v230 = vrot.slane %v180, 7
      %v231 = vrot.slane %v182, 7
      %v232 = vrot.slane %v184, 7
      %v233 = vrot.slane %v186, 7
      %v234 = vrot.slane %v188, 7
      %v235 = vrot.slane %v190, 7
      %v236 = vrot.slane %v192, 7
      %v237 = vrot.slane %v194, 7
      %v238 = vrot.slane %v196, 7
      %v239 = vrot.slane %v198, 7
      %v240 = vrot.slane %v200, 7
      %v241 = vrot.slane %v202, 7
      %v242 = vrot.slane %v204, 7
      %v243 = vrot.slane %v206, 7
      %vm244 = vcmp.lt.s32.totalorder %v208, 1
      %v245 = vsel %vm244, %v212, %v228
      %v246 = vsel %vm244, %v213, %v229
      %v247 = vsel %vm244, %v214, %v230
      %v248 = vsel %vm244, %v215, %v231
      %v249 = vsel %vm244, %v216, %v232
      %v250 = vsel %vm244, %v217, %v233
      %v251 = vsel %vm244, %v218, %v234
      %v252 = vsel %vm244, %v219, %v235
      %v253 = vsel %vm244, %v220, %v236
      %v254 = vsel %vm244, %v221, %v237
      %v255 = vsel %vm244, %v222, %v238
      %v256 = vsel %vm244, %v223, %v239
      %v257 = vsel %vm244, %v224, %v240
      %v258 = vsel %vm244, %v225, %v241
      %v259 = vsel %vm244, %v226, %v242
      %v260 = vsel %vm244, %v227, %v243
      %v261 = vsel %vm244, %v228, %v212
      %v262 = vsel %vm244, %v229, %v213
      %v263 = vsel %vm244, %v230, %v214
      %v264 = vsel %vm244, %v231, %v215
      %v265 = vsel %vm244, %v232, %v216
      %v266 = vsel %vm244, %v233, %v217
      %v267 = vsel %vm244, %v234, %v218
      %v268 = vsel %vm244, %v235, %v219
      %v269 = vsel %vm244, %v236, %v220
      %v270 = vsel %vm244, %v237, %v221
      %v271 = vsel %vm244, %v238, %v222
      %v272 = vsel %vm244, %v239, %v223
      %v273 = vsel %vm244, %v240, %v224
      %v274 = vsel %vm244, %v241, %v225
      %v275 = vsel %vm244, %v242, %v226
      %v276 = vsel %vm244, %v243, %v227
      %v277 = vsel %vm210, 0.0, %v261
      %v278 = vsel %vm211, 0.0, %v245
      %v279 = vsel %vm210, 0.0, %v262
      %v280 = vsel %vm211, 0.0, %v246
      %v281 = vsel %vm210, 0.0, %v263
      %v282 = vsel %vm211, 0.0, %v247
      %v283 = vsel %vm210, 0.0, %v264
      %v284 = vsel %vm211, 0.0, %v248
      %v285 = vsel %vm210, 0.0, %v265
      %v286 = vsel %vm211, 0.0, %v249
      %v287 = vsel %vm210, 0.0, %v266
      %v288 = vsel %vm211, 0.0, %v250
      %v289 = vsel %vm210, 0.0, %v267
      %v290 = vsel %vm211, 0.0, %v251
      %v291 = vsel %vm210, 0.0, %v268
      %v292 = vsel %vm211, 0.0, %v252
      %v293 = vsel %vm210, 0.0, %v269
      %v294 = vsel %vm211, 0.0, %v253
      %v295 = vsel %vm210, 0.0, %v270
      %v296 = vsel %vm211, 0.0, %v254
      %v297 = vsel %vm210, 0.0, %v271
      %v298 = vsel %vm211, 0.0, %v255
      %v299 = vsel %vm210, 0.0, %v272
      %v300 = vsel %vm211, 0.0, %v256
      %v301 = vsel %vm210, 0.0, %v273
      %v302 = vsel %vm211, 0.0, %v257
      %v303 = vsel %vm210, 0.0, %v274
      %v304 = vsel %vm211, 0.0, %v258
      %v305 = vsel %vm210, 0.0, %v275
      %v306 = vsel %vm211, 0.0, %v259
      %v307 = vsel %vm210, 0.0, %v276
      %v308 = vsel %vm211, 0.0, %v260
      %vm309 = vcmp.eq.s32.totalorder %v208, 15
      %vm310 = vcmp.eq.s32.totalorder %v209, 15
      %v311 = vrot.slane %v175, 1
      %v312 = vrot.slane %v177, 1
      %v313 = vrot.slane %v179, 1
      %v314 = vrot.slane %v181, 1
      %v315 = vrot.slane %v183, 1
      %v316 = vrot.slane %v185, 1
      %v317 = vrot.slane %v187, 1
      %v318 = vrot.slane %v189, 1
      %v319 = vrot.slane %v191, 1
      %v320 = vrot.slane %v193, 1
      %v321 = vrot.slane %v195, 1
      %v322 = vrot.slane %v197, 1
      %v323 = vrot.slane %v199, 1
      %v324 = vrot.slane %v201, 1
      %v325 = vrot.slane %v203, 1
      %v326 = vrot.slane %v205, 1
      %v327 = vrot.slane %v176, 1
      %v328 = vrot.slane %v178, 1
      %v329 = vrot.slane %v180, 1
      %v330 = vrot.slane %v182, 1
      %v331 = vrot.slane %v184, 1
      %v332 = vrot.slane %v186, 1
      %v333 = vrot.slane %v188, 1
      %v334 = vrot.slane %v190, 1
      %v335 = vrot.slane %v192, 1
      %v336 = vrot.slane %v194, 1
      %v337 = vrot.slane %v196, 1
      %v338 = vrot.slane %v198, 1
      %v339 = vrot.slane %v200, 1
      %v340 = vrot.slane %v202, 1
      %v341 = vrot.slane %v204, 1
      %v342 = vrot.slane %v206, 1
      %vm343 = vcmp.lt.s32.totalorder %v208, 7
      %v344 = vsel %vm343, %v311, %v327
      %v345 = vsel %vm343, %v312, %v328
      %v346 = vsel %vm343, %v313, %v329
      %v347 = vsel %vm343, %v314, %v330
      %v348 = vsel %vm343, %v315, %v331
      %v349 = vsel %vm343, %v316, %v332
      %v350 = vsel %vm343, %v317, %v333
      %v351 = vsel %vm343, %v318, %v334
      %v352 = vsel %vm343, %v319, %v335
      %v353 = vsel %vm343, %v320, %v336
      %v354 = vsel %vm343, %v321, %v337
      %v355 = vsel %vm343, %v322, %v338
      %v356 = vsel %vm343, %v323, %v339
      %v357 = vsel %vm343, %v324, %v340
      %v358 = vsel %vm343, %v325, %v341
      %v359 = vsel %vm343, %v326, %v342
      %v360 = vsel %vm343, %v327, %v311
      %v361 = vsel %vm343, %v328, %v312
      %v362 = vsel %vm343, %v329, %v313
      %v363 = vsel %vm343, %v330, %v314
      %v364 = vsel %vm343, %v331, %v315
      %v365 = vsel %vm343, %v332, %v316
      %v366 = vsel %vm343, %v333, %v317
      %v367 = vsel %vm343, %v334, %v318
      %v368 = vsel %vm343, %v335, %v319
      %v369 = vsel %vm343, %v336, %v320
      %v370 = vsel %vm343, %v337, %v321
      %v371 = vsel %vm343, %v338, %v322
      %v372 = vsel %vm343, %v339, %v323
      %v373 = vsel %vm343, %v340, %v324
      %v374 = vsel %vm343, %v341, %v325
      %v375 = vsel %vm343, %v342, %v326
      %v376 = vsel %vm309, 0.0, %v344
      %v377 = vsel %vm310, 0.0, %v360
      %v378 = vsel %vm309, 0.0, %v345
      %v379 = vsel %vm310, 0.0, %v361
      %v380 = vsel %vm309, 0.0, %v346
      %v381 = vsel %vm310, 0.0, %v362
      %v382 = vsel %vm309, 0.0, %v347
      %v383 = vsel %vm310, 0.0, %v363
      %v384 = vsel %vm309, 0.0, %v348
      %v385 = vsel %vm310, 0.0, %v364
      %v386 = vsel %vm309, 0.0, %v349
      %v387 = vsel %vm310, 0.0, %v365
      %v388 = vsel %vm309, 0.0, %v350
      %v389 = vsel %vm310, 0.0, %v366
      %v390 = vsel %vm309, 0.0, %v351
      %v391 = vsel %vm310, 0.0, %v367
      %v392 = vsel %vm309, 0.0, %v352
      %v393 = vsel %vm310, 0.0, %v368
      %v394 = vsel %vm309, 0.0, %v353
      %v395 = vsel %vm310, 0.0, %v369
      %v396 = vsel %vm309, 0.0, %v354
      %v397 = vsel %vm310, 0.0, %v370
      %v398 = vsel %vm309, 0.0, %v355
      %v399 = vsel %vm310, 0.0, %v371
      %v400 = vsel %vm309, 0.0, %v356
      %v401 = vsel %vm310, 0.0, %v372
      %v402 = vsel %vm309, 0.0, %v357
      %v403 = vsel %vm310, 0.0, %v373
      %v404 = vsel %vm309, 0.0, %v358
      %v405 = vsel %vm310, 0.0, %v374
      %v406 = vsel %vm309, 0.0, %v359
      %v407 = vsel %vm310, 0.0, %v375
      %v408 = vadd.f32 %v175, %v277
      %v409 = vadd.f32 %v176, %v278
      %v410 = vadd.f32 %v177, %v279
      %v411 = vadd.f32 %v178, %v280
      %v412 = vadd.f32 %v179, %v281
      %v413 = vadd.f32 %v180, %v282
      %v414 = vadd.f32 %v181, %v283
      %v415 = vadd.f32 %v182, %v284
      %v416 = vadd.f32 %v183, %v285
      %v417 = vadd.f32 %v184, %v286
      %v418 = vadd.f32 %v185, %v287
      %v419 = vadd.f32 %v186, %v288
      %v420 = vadd.f32 %v187, %v289
      %v421 = vadd.f32 %v188, %v290
      %v422 = vadd.f32 %v189, %v291
      %v423 = vadd.f32 %v190, %v292
      %v424 = vadd.f32 %v191, %v293
      %v425 = vadd.f32 %v192, %v294
      %v426 = vadd.f32 %v193, %v295
      %v427 = vadd.f32 %v194, %v296
      %v428 = vadd.f32 %v195, %v297
      %v429 = vadd.f32 %v196, %v298
      %v430 = vadd.f32 %v197, %v299
      %v431 = vadd.f32 %v198, %v300
      %v432 = vadd.f32 %v199, %v301
      %v433 = vadd.f32 %v200, %v302
      %v434 = vadd.f32 %v201, %v303
      %v435 = vadd.f32 %v202, %v304
      %v436 = vadd.f32 %v203, %v305
      %v437 = vadd.f32 %v204, %v306
      %v438 = vadd.f32 %v205, %v307
      %v439 = vadd.f32 %v206, %v308
      %v440 = vadd.f32 %v408, %v376
      %v441 = vadd.f32 %v409, %v377
      %v442 = vadd.f32 %v410, %v378
      %v443 = vadd.f32 %v411, %v379
      %v444 = vadd.f32 %v412, %v380
      %v445 = vadd.f32 %v413, %v381
      %v446 = vadd.f32 %v414, %v382
      %v447 = vadd.f32 %v415, %v383
      %v448 = vadd.f32 %v416, %v384
      %v449 = vadd.f32 %v417, %v385
      %v450 = vadd.f32 %v418, %v386
      %v451 = vadd.f32 %v419, %v387
      %v452 = vadd.f32 %v420, %v388
      %v453 = vadd.f32 %v421, %v389
      %v454 = vadd.f32 %v422, %v390
      %v455 = vadd.f32 %v423, %v391
      %v456 = vadd.f32 %v424, %v392
      %v457 = vadd.f32 %v425, %v393
      %v458 = vadd.f32 %v426, %v394
      %v459 = vadd.f32 %v427, %v395
      %v460 = vadd.f32 %v428, %v396
      %v461 = vadd.f32 %v429, %v397
      %v462 = vadd.f32 %v430, %v398
      %v463 = vadd.f32 %v431, %v399
      %v464 = vadd.f32 %v432, %v400
      %v465 = vadd.f32 %v433, %v401
      %v466 = vadd.f32 %v434, %v402
      %v467 = vadd.f32 %v435, %v403
      %v468 = vadd.f32 %v436, %v404
      %v469 = vadd.f32 %v437, %v405
      %v470 = vadd.f32 %v438, %v406
      %v471 = vadd.f32 %v439, %v407
      %vm472 = vcmask 31744
      %473 = vst.msk [vmem:[#allocation2] sm:$0xff] %vm472, %v440
      %474 = vst.msk [vmem:[#allocation2 + $0x8] sm:$0xff] %vm472, %v441
      %475 = vst.msk [vmem:[#allocation2 + $0x10] sm:$0xff] %vm472, %v442
      %476 = vst.msk [vmem:[#allocation2 + $0x18] sm:$0xff] %vm472, %v443
      %477 = vst.msk [vmem:[#allocation2 + $0x20] sm:$0xff] %vm472, %v444
      %478 = vst.msk [vmem:[#allocation2 + $0x28] sm:$0xff] %vm472, %v445
      %479 = vst.msk [vmem:[#allocation2 + $0x30] sm:$0xff] %vm472, %v446
      %480 = vst.msk [vmem:[#allocation2 + $0x38] sm:$0xff] %vm472, %v447
      %481 = vst.msk [vmem:[#allocation2 + $0x40] sm:$0xff] %vm472, %v448
      %482 = vst.msk [vmem:[#allocation2 + $0x48] sm:$0xff] %vm472, %v449
      %483 = vst.msk [vmem:[#allocation2 + $0x50] sm:$0xff] %vm472, %v450
      %484 = vst.msk [vmem:[#allocation2 + $0x58] sm:$0xff] %vm472, %v451
      %485 = vst.msk [vmem:[#allocation2 + $0x60] sm:$0xff] %vm472, %v452
      %486 = vst.msk [vmem:[#allocation2 + $0x68] sm:$0xff] %vm472, %v453
      %487 = vst.msk [vmem:[#allocation2 + $0x70] sm:$0xff] %vm472, %v454
      %488 = vst.msk [vmem:[#allocation2 + $0x78] sm:$0xff] %vm472, %v455
      %489 = vst.msk [vmem:[#allocation2 + $0x80] sm:$0xff] %vm472, %v456
      %490 = vst.msk [vmem:[#allocation2 + $0x88] sm:$0xff] %vm472, %v457
      %491 = vst.msk [vmem:[#allocation2 + $0x90] sm:$0xff] %vm472, %v458
      %492 = vst.msk [vmem:[#allocation2 + $0x98] sm:$0xff] %vm472, %v459
      %493 = vst.msk [vmem:[#allocation2 + $0xa0] sm:$0xff] %vm472, %v460
      %494 = vst.msk [vmem:[#allocation2 + $0xa8] sm:$0xff] %vm472, %v461
      %495 = vst.msk [vmem:[#allocation2 + $0xb0] sm:$0xff] %vm472, %v462
      %496 = vst.msk [vmem:[#allocation2 + $0xb8] sm:$0xff] %vm472, %v463
      %497 = vst.msk [vmem:[#allocation2 + $0xc0] sm:$0xff] %vm472, %v464
      %498 = vst.msk [vmem:[#allocation2 + $0xc8] sm:$0xff] %vm472, %v465
      %499 = vst.msk [vmem:[#allocation2 + $0xd0] sm:$0xff] %vm472, %v466
      %500 = vst.msk [vmem:[#allocation2 + $0xd8] sm:$0xff] %vm472, %v467
      %501 = vst.msk [vmem:[#allocation2 + $0xe0] sm:$0xff] %vm472, %v468
      %502 = vst.msk [vmem:[#allocation2 + $0xe8] sm:$0xff] %vm472, %v469
      %503 = vst.msk [vmem:[#allocation2 + $0xf0] sm:$0xff] %vm472, %v470
      %504 = vst.msk [vmem:[#allocation2 + $0xf8] sm:$0xff] %vm472, %v471
      %v505 = vld [vmem:[#allocation2] sm:$0xff]
      %v506 = vld [vmem:[#allocation2 + $0x8] sm:$0xff]
      %v507 = vld [vmem:[#allocation2 + $0x10] sm:$0xff]
      %v508 = vld [vmem:[#allocation2 + $0x18] sm:$0xff]
      %v509 = vld [vmem:[#allocation2 + $0x20] sm:$0xff]
      %v510 = vld [vmem:[#allocation2 + $0x28] sm:$0xff]
      %v511 = vld [vmem:[#allocation2 + $0x30] sm:$0xff]
      %v512 = vld [vmem:[#allocation2 + $0x38] sm:$0xff]
      %v513 = vld [vmem:[#allocation2 + $0x40] sm:$0xff]
      %v514 = vld [vmem:[#allocation2 + $0x48] sm:$0xff]
      %v515 = vld [vmem:[#allocation2 + $0x50] sm:$0xff]
      %v516 = vld [vmem:[#allocation2 + $0x58] sm:$0xff]
      %v517 = vld [vmem:[#allocation2 + $0x60] sm:$0xff]
      %v518 = vld [vmem:[#allocation2 + $0x68] sm:$0xff]
      %v519 = vld [vmem:[#allocation2 + $0x70] sm:$0xff]
      %v520 = vld [vmem:[#allocation2 + $0x78] sm:$0xff]
      %v521 = vld [vmem:[#allocation2 + $0x80] sm:$0xff]
      %v522 = vld [vmem:[#allocation2 + $0x88] sm:$0xff]
      %v523 = vld [vmem:[#allocation2 + $0x90] sm:$0xff]
      %v524 = vld [vmem:[#allocation2 + $0x98] sm:$0xff]
      %v525 = vld [vmem:[#allocation2 + $0xa0] sm:$0xff]
      %v526 = vld [vmem:[#allocation2 + $0xa8] sm:$0xff]
      %v527 = vld [vmem:[#allocation2 + $0xb0] sm:$0xff]
      %v528 = vld [vmem:[#allocation2 + $0xb8] sm:$0xff]
      %v529 = vld [vmem:[#allocation2 + $0xc0] sm:$0xff]
      %v530 = vld [vmem:[#allocation2 + $0xc8] sm:$0xff]
      %v531 = vld [vmem:[#allocation2 + $0xd0] sm:$0xff]
      %v532 = vld [vmem:[#allocation2 + $0xd8] sm:$0xff]
      %v533 = vld [vmem:[#allocation2 + $0xe0] sm:$0xff]
      %v534 = vld [vmem:[#allocation2 + $0xe8] sm:$0xff]
      %v535 = vld [vmem:[#allocation2 + $0xf0] sm:$0xff]
      %v536 = vld [vmem:[#allocation2 + $0xf8] sm:$0xff]
      %537 = vst.msk [vmem:[#allocation3] sm:$0xff] %vm472, %v505
      %538 = vst.msk [vmem:[#allocation3 + $0x8] sm:$0xff] %vm472, %v506
      %539 = vst.msk [vmem:[#allocation3 + $0x10] sm:$0xff] %vm472, %v507
      %540 = vst.msk [vmem:[#allocation3 + $0x18] sm:$0xff] %vm472, %v508
      %541 = vst.msk [vmem:[#allocation3 + $0x20] sm:$0xff] %vm472, %v509
      %542 = vst.msk [vmem:[#allocation3 + $0x28] sm:$0xff] %vm472, %v510
      %543 = vst.msk [vmem:[#allocation3 + $0x30] sm:$0xff] %vm472, %v511
      %544 = vst.msk [vmem:[#allocation3 + $0x38] sm:$0xff] %vm472, %v512
      %545 = vst.msk [vmem:[#allocation3 + $0x40] sm:$0xff] %vm472, %v513
      %546 = vst.msk [vmem:[#allocation3 + $0x48] sm:$0xff] %vm472, %v514
      %547 = vst.msk [vmem:[#allocation3 + $0x50] sm:$0xff] %vm472, %v515
      %548 = vst.msk [vmem:[#allocation3 + $0x58] sm:$0xff] %vm472, %v516
      %549 = vst.msk [vmem:[#allocation3 + $0x60] sm:$0xff] %vm472, %v517
      %550 = vst.msk [vmem:[#allocation3 + $0x68] sm:$0xff] %vm472, %v518
      %551 = vst.msk [vmem:[#allocation3 + $0x70] sm:$0xff] %vm472, %v519
      %552 = vst.msk [vmem:[#allocation3 + $0x78] sm:$0xff] %vm472, %v520
      %553 = vst.msk [vmem:[#allocation3 + $0x80] sm:$0xff] %vm472, %v521
      %554 = vst.msk [vmem:[#allocation3 + $0x88] sm:$0xff] %vm472, %v522
      %555 = vst.msk [vmem:[#allocation3 + $0x90] sm:$0xff] %vm472, %v523
      %556 = vst.msk [vmem:[#allocation3 + $0x98] sm:$0xff] %vm472, %v524
      %557 = vst.msk [vmem:[#allocation3 + $0xa0] sm:$0xff] %vm472, %v525
      %558 = vst.msk [vmem:[#allocation3 + $0xa8] sm:$0xff] %vm472, %v526
      %559 = vst.msk [vmem:[#allocation3 + $0xb0] sm:$0xff] %vm472, %v527
      %560 = vst.msk [vmem:[#allocation3 + $0xb8] sm:$0xff] %vm472, %v528
      %561 = vst.msk [vmem:[#allocation3 + $0xc0] sm:$0xff] %vm472, %v529
      %562 = vst.msk [vmem:[#allocation3 + $0xc8] sm:$0xff] %vm472, %v530
      %563 = vst.msk [vmem:[#allocation3 + $0xd0] sm:$0xff] %vm472, %v531
      %564 = vst.msk [vmem:[#allocation3 + $0xd8] sm:$0xff] %vm472, %v532
      %565 = vst.msk [vmem:[#allocation3 + $0xe0] sm:$0xff] %vm472, %v533
      %566 = vst.msk [vmem:[#allocation3 + $0xe8] sm:$0xff] %vm472, %v534
      %567 = vst.msk [vmem:[#allocation3 + $0xf0] sm:$0xff] %vm472, %v535
      %568 = vst.msk [vmem:[#allocation3 + $0xf8] sm:$0xff] %vm472, %v536
      %v569 = vld [vmem:[#allocation3] sm:$0xff]
      %v570 = vld [vmem:[#allocation3 + $0x8] sm:$0xff]
      %v571 = vld [vmem:[#allocation3 + $0x10] sm:$0xff]
      %v572 = vld [vmem:[#allocation3 + $0x18] sm:$0xff]
      %v573 = vld [vmem:[#allocation3 + $0x20] sm:$0xff]
      %v574 = vld [vmem:[#allocation3 + $0x28] sm:$0xff]
      %v575 = vld [vmem:[#allocation3 + $0x30] sm:$0xff]
      %v576 = vld [vmem:[#allocation3 + $0x38] sm:$0xff]
      %v577 = vld [vmem:[#allocation3 + $0x40] sm:$0xff]
      %v578 = vld [vmem:[#allocation3 + $0x48] sm:$0xff]
      %v579 = vld [vmem:[#allocation3 + $0x50] sm:$0xff]
      %v580 = vld [vmem:[#allocation3 + $0x58] sm:$0xff]
      %v581 = vld [vmem:[#allocation3 + $0x60] sm:$0xff]
      %v582 = vld [vmem:[#allocation3 + $0x68] sm:$0xff]
      %v583 = vld [vmem:[#allocation3 + $0x70] sm:$0xff]
      %v584 = vld [vmem:[#allocation3 + $0x78] sm:$0xff]
      %v585 = vld [vmem:[#allocation3 + $0x80] sm:$0xff]
      %v586 = vld [vmem:[#allocation3 + $0x88] sm:$0xff]
      %v587 = vld [vmem:[#allocation3 + $0x90] sm:$0xff]
      %v588 = vld [vmem:[#allocation3 + $0x98] sm:$0xff]
      %v589 = vld [vmem:[#allocation3 + $0xa0] sm:$0xff]
      %v590 = vld [vmem:[#allocation3 + $0xa8] sm:$0xff]
      %v591 = vld [vmem:[#allocation3 + $0xb0] sm:$0xff]
      %v592 = vld [vmem:[#allocation3 + $0xb8] sm:$0xff]
      %v593 = vld [vmem:[#allocation3 + $0xc0] sm:$0xff]
      %v594 = vld [vmem:[#allocation3 + $0xc8] sm:$0xff]
      %v595 = vld [vmem:[#allocation3 + $0xd0] sm:$0xff]
      %v596 = vld [vmem:[#allocation3 + $0xd8] sm:$0xff]
      %v597 = vld [vmem:[#allocation3 + $0xe0] sm:$0xff]
      %v598 = vld [vmem:[#allocation3 + $0xe8] sm:$0xff]
      %s599 = scalar_lea.vmem [#allocation2], 16
      %v600 = vld [vmem:[%s599] sm:$0xff]
      %v601 = vld [vmem:[%s599 + $0x8] sm:$0xff]
      %v602 = vld [vmem:[%s599 + $0x10] sm:$0xff]
      %v603 = vld [vmem:[%s599 + $0x18] sm:$0xff]
      %v604 = vld [vmem:[%s599 + $0x20] sm:$0xff]
      %v605 = vld [vmem:[%s599 + $0x28] sm:$0xff]
      %v606 = vld [vmem:[%s599 + $0x30] sm:$0xff]
      %v607 = vld [vmem:[%s599 + $0x38] sm:$0xff]
      %v608 = vld [vmem:[%s599 + $0x40] sm:$0xff]
      %v609 = vld [vmem:[%s599 + $0x48] sm:$0xff]
      %v610 = vld [vmem:[%s599 + $0x50] sm:$0xff]
      %v611 = vld [vmem:[%s599 + $0x58] sm:$0xff]
      %v612 = vld [vmem:[%s599 + $0x60] sm:$0xff]
      %v613 = vld [vmem:[%s599 + $0x68] sm:$0xff]
      %v614 = vld [vmem:[%s599 + $0x70] sm:$0xff]
      %v615 = vld [vmem:[%s599 + $0x78] sm:$0xff]
      %v616 = vld [vmem:[%s599 + $0x80] sm:$0xff]
      %v617 = vld [vmem:[%s599 + $0x88] sm:$0xff]
      %v618 = vld [vmem:[%s599 + $0x90] sm:$0xff]
      %v619 = vld [vmem:[%s599 + $0x98] sm:$0xff]
      %v620 = vld [vmem:[%s599 + $0xa0] sm:$0xff]
      %v621 = vld [vmem:[%s599 + $0xa8] sm:$0xff]
      %v622 = vld [vmem:[%s599 + $0xb0] sm:$0xff]
      %v623 = vld [vmem:[%s599 + $0xb8] sm:$0xff]
      %v624 = vld [vmem:[%s599 + $0xc0] sm:$0xff]
      %v625 = vld [vmem:[%s599 + $0xc8] sm:$0xff]
      %v626 = vld [vmem:[%s599 + $0xd0] sm:$0xff]
      %v627 = vld [vmem:[%s599 + $0xd8] sm:$0xff]
      %v628 = vld [vmem:[%s599 + $0xe0] sm:$0xff]
      %v629 = vld [vmem:[%s599 + $0xe8] sm:$0xff]
      %v630 = vadd.f32 %v569, %v600
      %v631 = vadd.f32 %v570, %v601
      %v632 = vadd.f32 %v571, %v602
      %v633 = vadd.f32 %v572, %v603
      %v634 = vadd.f32 %v573, %v604
      %v635 = vadd.f32 %v574, %v605
      %v636 = vadd.f32 %v575, %v606
      %v637 = vadd.f32 %v576, %v607
      %v638 = vadd.f32 %v577, %v608
      %v639 = vadd.f32 %v578, %v609
      %v640 = vadd.f32 %v579, %v610
      %v641 = vadd.f32 %v580, %v611
      %v642 = vadd.f32 %v581, %v612
      %v643 = vadd.f32 %v582, %v613
      %v644 = vadd.f32 %v583, %v614
      %v645 = vadd.f32 %v584, %v615
      %v646 = vadd.f32 %v585, %v616
      %v647 = vadd.f32 %v586, %v617
      %v648 = vadd.f32 %v587, %v618
      %v649 = vadd.f32 %v588, %v619
      %v650 = vadd.f32 %v589, %v620
      %v651 = vadd.f32 %v590, %v621
      %v652 = vadd.f32 %v591, %v622
      %v653 = vadd.f32 %v592, %v623
      %v654 = vadd.f32 %v593, %v624
      %v655 = vadd.f32 %v594, %v625
      %v656 = vadd.f32 %v595, %v626
      %v657 = vadd.f32 %v596, %v627
      %v658 = vadd.f32 %v597, %v628
      %v659 = vadd.f32 %v598, %v629
      %660 = vst.msk [vmem:[#allocation3] sm:$0xff] %vm472, %v630
      %661 = vst.msk [vmem:[#allocation3 + $0x8] sm:$0xff] %vm472, %v631
      %662 = vst.msk [vmem:[#allocation3 + $0x10] sm:$0xff] %vm472, %v632
      %663 = vst.msk [vmem:[#allocation3 + $0x18] sm:$0xff] %vm472, %v633
      %664 = vst.msk [vmem:[#allocation3 + $0x20] sm:$0xff] %vm472, %v634
      %665 = vst.msk [vmem:[#allocation3 + $0x28] sm:$0xff] %vm472, %v635
      %666 = vst.msk [vmem:[#allocation3 + $0x30] sm:$0xff] %vm472, %v636
      %667 = vst.msk [vmem:[#allocation3 + $0x38] sm:$0xff] %vm472, %v637
      %668 = vst.msk [vmem:[#allocation3 + $0x40] sm:$0xff] %vm472, %v638
      %669 = vst.msk [vmem:[#allocation3 + $0x48] sm:$0xff] %vm472, %v639
      %670 = vst.msk [vmem:[#allocation3 + $0x50] sm:$0xff] %vm472, %v640
      %671 = vst.msk [vmem:[#allocation3 + $0x58] sm:$0xff] %vm472, %v641
      %672 = vst.msk [vmem:[#allocation3 + $0x60] sm:$0xff] %vm472, %v642
      %673 = vst.msk [vmem:[#allocation3 + $0x68] sm:$0xff] %vm472, %v643
      %674 = vst.msk [vmem:[#allocation3 + $0x70] sm:$0xff] %vm472, %v644
      %675 = vst.msk [vmem:[#allocation3 + $0x78] sm:$0xff] %vm472, %v645
      %676 = vst.msk [vmem:[#allocation3 + $0x80] sm:$0xff] %vm472, %v646
      %677 = vst.msk [vmem:[#allocation3 + $0x88] sm:$0xff] %vm472, %v647
      %678 = vst.msk [vmem:[#allocation3 + $0x90] sm:$0xff] %vm472, %v648
      %679 = vst.msk [vmem:[#allocation3 + $0x98] sm:$0xff] %vm472, %v649
      %680 = vst.msk [vmem:[#allocation3 + $0xa0] sm:$0xff] %vm472, %v650
      %681 = vst.msk [vmem:[#allocation3 + $0xa8] sm:$0xff] %vm472, %v651
      %682 = vst.msk [vmem:[#allocation3 + $0xb0] sm:$0xff] %vm472, %v652
      %683 = vst.msk [vmem:[#allocation3 + $0xb8] sm:$0xff] %vm472, %v653
      %684 = vst.msk [vmem:[#allocation3 + $0xc0] sm:$0xff] %vm472, %v654
      %685 = vst.msk [vmem:[#allocation3 + $0xc8] sm:$0xff] %vm472, %v655
      %686 = vst.msk [vmem:[#allocation3 + $0xd0] sm:$0xff] %vm472, %v656
      %687 = vst.msk [vmem:[#allocation3 + $0xd8] sm:$0xff] %vm472, %v657
      %688 = vst.msk [vmem:[#allocation3 + $0xe0] sm:$0xff] %vm472, %v658
      %689 = vst.msk [vmem:[#allocation3 + $0xe8] sm:$0xff] %vm472, %v659
      %s690 = scalar_lea.vmem [#allocation3], 16
      %v691 = vld [vmem:[%s690] sm:$0xff]
      %v692 = vld [vmem:[%s690 + $0x8] sm:$0xff]
      %v693 = vld [vmem:[%s690 + $0x10] sm:$0xff]
      %v694 = vld [vmem:[%s690 + $0x18] sm:$0xff]
      %v695 = vld [vmem:[%s690 + $0x20] sm:$0xff]
      %v696 = vld [vmem:[%s690 + $0x28] sm:$0xff]
      %v697 = vld [vmem:[%s690 + $0x30] sm:$0xff]
      %v698 = vld [vmem:[%s690 + $0x38] sm:$0xff]
      %v699 = vld [vmem:[%s690 + $0x40] sm:$0xff]
      %v700 = vld [vmem:[%s690 + $0x48] sm:$0xff]
      %v701 = vld [vmem:[%s690 + $0x50] sm:$0xff]
      %v702 = vld [vmem:[%s690 + $0x58] sm:$0xff]
      %v703 = vld [vmem:[%s690 + $0x60] sm:$0xff]
      %v704 = vld [vmem:[%s690 + $0x68] sm:$0xff]
      %v705 = vld [vmem:[%s690 + $0x70] sm:$0xff]
      %v706 = vld [vmem:[%s690 + $0x78] sm:$0xff]
      %v707 = vld [vmem:[%s690 + $0x80] sm:$0xff]
      %v708 = vld [vmem:[%s690 + $0x88] sm:$0xff]
      %v709 = vld [vmem:[%s690 + $0x90] sm:$0xff]
      %v710 = vld [vmem:[%s690 + $0x98] sm:$0xff]
      %v711 = vld [vmem:[%s690 + $0xa0] sm:$0xff]
      %v712 = vld [vmem:[%s690 + $0xa8] sm:$0xff]
      %v713 = vld [vmem:[%s690 + $0xb0] sm:$0xff]
      %v714 = vld [vmem:[%s690 + $0xb8] sm:$0xff]
      %v715 = vld [vmem:[%s690 + $0xc0] sm:$0xff]
      %v716 = vld [vmem:[%s690 + $0xc8] sm:$0xff]
      %v717 = vld [vmem:[%s690 + $0xd0] sm:$0xff]
      %v718 = vld [vmem:[%s690 + $0xd8] sm:$0xff]
      %v719 = vld [vmem:[%s690 + $0xe0] sm:$0xff]
      %v720 = vld [vmem:[%s690 + $0xe8] sm:$0xff]
      %v721 = vld [vmem:[#allocation2] sm:$0xff]
      %v722 = vld [vmem:[#allocation2 + $0x8] sm:$0xff]
      %v723 = vld [vmem:[#allocation2 + $0x10] sm:$0xff]
      %v724 = vld [vmem:[#allocation2 + $0x18] sm:$0xff]
      %v725 = vld [vmem:[#allocation2 + $0x20] sm:$0xff]
      %v726 = vld [vmem:[#allocation2 + $0x28] sm:$0xff]
      %v727 = vld [vmem:[#allocation2 + $0x30] sm:$0xff]
      %v728 = vld [vmem:[#allocation2 + $0x38] sm:$0xff]
      %v729 = vld [vmem:[#allocation2 + $0x40] sm:$0xff]
      %v730 = vld [vmem:[#allocation2 + $0x48] sm:$0xff]
      %v731 = vld [vmem:[#allocation2 + $0x50] sm:$0xff]
      %v732 = vld [vmem:[#allocation2 + $0x58] sm:$0xff]
      %v733 = vld [vmem:[#allocation2 + $0x60] sm:$0xff]
      %v734 = vld [vmem:[#allocation2 + $0x68] sm:$0xff]
      %v735 = vld [vmem:[#allocation2 + $0x70] sm:$0xff]
      %v736 = vld [vmem:[#allocation2 + $0x78] sm:$0xff]
      %v737 = vld [vmem:[#allocation2 + $0x80] sm:$0xff]
      %v738 = vld [vmem:[#allocation2 + $0x88] sm:$0xff]
      %v739 = vld [vmem:[#allocation2 + $0x90] sm:$0xff]
      %v740 = vld [vmem:[#allocation2 + $0x98] sm:$0xff]
      %v741 = vld [vmem:[#allocation2 + $0xa0] sm:$0xff]
      %v742 = vld [vmem:[#allocation2 + $0xa8] sm:$0xff]
      %v743 = vld [vmem:[#allocation2 + $0xb0] sm:$0xff]
      %v744 = vld [vmem:[#allocation2 + $0xb8] sm:$0xff]
      %v745 = vld [vmem:[#allocation2 + $0xc0] sm:$0xff]
      %v746 = vld [vmem:[#allocation2 + $0xc8] sm:$0xff]
      %v747 = vld [vmem:[#allocation2 + $0xd0] sm:$0xff]
      %v748 = vld [vmem:[#allocation2 + $0xd8] sm:$0xff]
      %v749 = vld [vmem:[#allocation2 + $0xe0] sm:$0xff]
      %v750 = vld [vmem:[#allocation2 + $0xe8] sm:$0xff]
      %v751 = vadd.f32 %v691, %v721
      %v752 = vadd.f32 %v692, %v722
      %v753 = vadd.f32 %v693, %v723
      %v754 = vadd.f32 %v694, %v724
      %v755 = vadd.f32 %v695, %v725
      %v756 = vadd.f32 %v696, %v726
      %v757 = vadd.f32 %v697, %v727
      %v758 = vadd.f32 %v698, %v728
      %v759 = vadd.f32 %v699, %v729
      %v760 = vadd.f32 %v700, %v730
      %v761 = vadd.f32 %v701, %v731
      %v762 = vadd.f32 %v702, %v732
      %v763 = vadd.f32 %v703, %v733
      %v764 = vadd.f32 %v704, %v734
      %v765 = vadd.f32 %v705, %v735
      %v766 = vadd.f32 %v706, %v736
      %v767 = vadd.f32 %v707, %v737
      %v768 = vadd.f32 %v708, %v738
      %v769 = vadd.f32 %v709, %v739
      %v770 = vadd.f32 %v710, %v740
      %v771 = vadd.f32 %v711, %v741
      %v772 = vadd.f32 %v712, %v742
      %v773 = vadd.f32 %v713, %v743
      %v774 = vadd.f32 %v714, %v744
      %v775 = vadd.f32 %v715, %v745
      %v776 = vadd.f32 %v716, %v746
      %v777 = vadd.f32 %v717, %v747
      %v778 = vadd.f32 %v718, %v748
      %v779 = vadd.f32 %v719, %v749
      %v780 = vadd.f32 %v720, %v750
      %781 = vst.msk [vmem:[%s690] sm:$0xff] %vm472, %v751
      %782 = vst.msk [vmem:[%s690 + $0x8] sm:$0xff] %vm472, %v752
      %783 = vst.msk [vmem:[%s690 + $0x10] sm:$0xff] %vm472, %v753
      %784 = vst.msk [vmem:[%s690 + $0x18] sm:$0xff] %vm472, %v754
      %785 = vst.msk [vmem:[%s690 + $0x20] sm:$0xff] %vm472, %v755
      %786 = vst.msk [vmem:[%s690 + $0x28] sm:$0xff] %vm472, %v756
      %787 = vst.msk [vmem:[%s690 + $0x30] sm:$0xff] %vm472, %v757
      %788 = vst.msk [vmem:[%s690 + $0x38] sm:$0xff] %vm472, %v758
      %789 = vst.msk [vmem:[%s690 + $0x40] sm:$0xff] %vm472, %v759
      %790 = vst.msk [vmem:[%s690 + $0x48] sm:$0xff] %vm472, %v760
      %791 = vst.msk [vmem:[%s690 + $0x50] sm:$0xff] %vm472, %v761
      %792 = vst.msk [vmem:[%s690 + $0x58] sm:$0xff] %vm472, %v762
      %793 = vst.msk [vmem:[%s690 + $0x60] sm:$0xff] %vm472, %v763
      %794 = vst.msk [vmem:[%s690 + $0x68] sm:$0xff] %vm472, %v764
      %795 = vst.msk [vmem:[%s690 + $0x70] sm:$0xff] %vm472, %v765
      %796 = vst.msk [vmem:[%s690 + $0x78] sm:$0xff] %vm472, %v766
      %797 = vst.msk [vmem:[%s690 + $0x80] sm:$0xff] %vm472, %v767
      %798 = vst.msk [vmem:[%s690 + $0x88] sm:$0xff] %vm472, %v768
      %799 = vst.msk [vmem:[%s690 + $0x90] sm:$0xff] %vm472, %v769
      %800 = vst.msk [vmem:[%s690 + $0x98] sm:$0xff] %vm472, %v770
      %801 = vst.msk [vmem:[%s690 + $0xa0] sm:$0xff] %vm472, %v771
      %802 = vst.msk [vmem:[%s690 + $0xa8] sm:$0xff] %vm472, %v772
      %803 = vst.msk [vmem:[%s690 + $0xb0] sm:$0xff] %vm472, %v773
      %804 = vst.msk [vmem:[%s690 + $0xb8] sm:$0xff] %vm472, %v774
      %805 = vst.msk [vmem:[%s690 + $0xc0] sm:$0xff] %vm472, %v775
      %806 = vst.msk [vmem:[%s690 + $0xc8] sm:$0xff] %vm472, %v776
      %807 = vst.msk [vmem:[%s690 + $0xd0] sm:$0xff] %vm472, %v777
      %808 = vst.msk [vmem:[%s690 + $0xd8] sm:$0xff] %vm472, %v778
      %809 = vst.msk [vmem:[%s690 + $0xe0] sm:$0xff] %vm472, %v779
      %810 = vst.msk [vmem:[%s690 + $0xe8] sm:$0xff] %vm472, %v780
      %v811 = vld [vmem:[%s0] sm:$0xff]
      %v812 = vld [vmem:[%s0 + $0x8] sm:$0xff]
      %v813 = vld [vmem:[%s0 + $0x10] sm:$0xff]
      %v814 = vld [vmem:[%s0 + $0x18] sm:$0xff]
      %v815 = vld [vmem:[%s0 + $0x20] sm:$0xff]
      %v816 = vld [vmem:[%s0 + $0x28] sm:$0xff]
      %v817 = vld [vmem:[%s0 + $0x30] sm:$0xff]
      %v818 = vld [vmem:[%s0 + $0x38] sm:$0xff]
      %v819 = vld [vmem:[%s0 + $0x40] sm:$0xff]
      %v820 = vld [vmem:[%s0 + $0x48] sm:$0xff]
      %v821 = vld [vmem:[%s0 + $0x50] sm:$0xff]
      %v822 = vld [vmem:[%s0 + $0x58] sm:$0xff]
      %v823 = vld [vmem:[%s0 + $0x60] sm:$0xff]
      %v824 = vld [vmem:[%s0 + $0x68] sm:$0xff]
      %v825 = vld [vmem:[%s0 + $0x70] sm:$0xff]
      %v826 = vld [vmem:[%s0 + $0x78] sm:$0xff]
      %v827 = vld [vmem:[%s0 + $0x80] sm:$0xff]
      %v828 = vld [vmem:[%s0 + $0x88] sm:$0xff]
      %v829 = vld [vmem:[%s0 + $0x90] sm:$0xff]
      %v830 = vld [vmem:[%s0 + $0x98] sm:$0xff]
      %v831 = vld [vmem:[%s0 + $0xa0] sm:$0xff]
      %v832 = vld [vmem:[%s0 + $0xa8] sm:$0xff]
      %v833 = vld [vmem:[%s0 + $0xb0] sm:$0xff]
      %v834 = vld [vmem:[%s0 + $0xb8] sm:$0xff]
      %v835 = vld [vmem:[%s0 + $0xc0] sm:$0xff]
      %v836 = vld [vmem:[%s0 + $0xc8] sm:$0xff]
      %v837 = vld [vmem:[%s0 + $0xd0] sm:$0xff]
      %v838 = vld [vmem:[%s0 + $0xd8] sm:$0xff]
      %v839 = vld [vmem:[%s0 + $0xe0] sm:$0xff]
      %v840 = vld [vmem:[%s0 + $0xe8] sm:$0xff]
      %v841 = vld [vmem:[%s0 + $0xf0] sm:$0xff]
      %v842 = vld [vmem:[%s0 + $0xf8] sm:$0xff]
      %v843 = vld [vmem:[#allocation3] sm:$0xff]
      %v844 = vld [vmem:[#allocation3 + $0x8] sm:$0xff]
      %v845 = vld [vmem:[#allocation3 + $0x10] sm:$0xff]
      %v846 = vld [vmem:[#allocation3 + $0x18] sm:$0xff]
      %v847 = vld [vmem:[#allocation3 + $0x20] sm:$0xff]
      %v848 = vld [vmem:[#allocation3 + $0x28] sm:$0xff]
      %v849 = vld [vmem:[#allocation3 + $0x30] sm:$0xff]
      %v850 = vld [vmem:[#allocation3 + $0x38] sm:$0xff]
      %v851 = vld [vmem:[#allocation3 + $0x40] sm:$0xff]
      %v852 = vld [vmem:[#allocation3 + $0x48] sm:$0xff]
      %v853 = vld [vmem:[#allocation3 + $0x50] sm:$0xff]
      %v854 = vld [vmem:[#allocation3 + $0x58] sm:$0xff]
      %v855 = vld [vmem:[#allocation3 + $0x60] sm:$0xff]
      %v856 = vld [vmem:[#allocation3 + $0x68] sm:$0xff]
      %v857 = vld [vmem:[#allocation3 + $0x70] sm:$0xff]
      %v858 = vld [vmem:[#allocation3 + $0x78] sm:$0xff]
      %v859 = vld [vmem:[#allocation3 + $0x80] sm:$0xff]
      %v860 = vld [vmem:[#allocation3 + $0x88] sm:$0xff]
      %v861 = vld [vmem:[#allocation3 + $0x90] sm:$0xff]
      %v862 = vld [vmem:[#allocation3 + $0x98] sm:$0xff]
      %v863 = vld [vmem:[#allocation3 + $0xa0] sm:$0xff]
      %v864 = vld [vmem:[#allocation3 + $0xa8] sm:$0xff]
      %v865 = vld [vmem:[#allocation3 + $0xb0] sm:$0xff]
      %v866 = vld [vmem:[#allocation3 + $0xb8] sm:$0xff]
      %v867 = vld [vmem:[#allocation3 + $0xc0] sm:$0xff]
      %v868 = vld [vmem:[#allocation3 + $0xc8] sm:$0xff]
      %v869 = vld [vmem:[#allocation3 + $0xd0] sm:$0xff]
      %v870 = vld [vmem:[#allocation3 + $0xd8] sm:$0xff]
      %v871 = vld [vmem:[#allocation3 + $0xe0] sm:$0xff]
      %v872 = vld [vmem:[#allocation3 + $0xe8] sm:$0xff]
      %v873 = vld [vmem:[#allocation3 + $0xf0] sm:$0xff]
      %v874 = vld [vmem:[#allocation3 + $0xf8] sm:$0xff]
      %876 = vset.pattern.permute.xlu0 0
      %877 = vperm.xlu0 %876, %v811
      %v878 = vpop.permute.xlu0 %877
      %881 = vset.pattern.permute.xlu0 0
      %882 = vperm.xlu0 %881, %v812
      %v883 = vpop.permute.xlu0 %882
      %886 = vset.pattern.permute.xlu0 0
      %887 = vperm.xlu0 %886, %v813
      %v888 = vpop.permute.xlu0 %887
      %891 = vset.pattern.permute.xlu0 0
      %892 = vperm.xlu0 %891, %v814
      %v893 = vpop.permute.xlu0 %892
      %896 = vset.pattern.permute.xlu0 0
      %897 = vperm.xlu0 %896, %v815
      %v898 = vpop.permute.xlu0 %897
      %901 = vset.pattern.permute.xlu0 0
      %902 = vperm.xlu0 %901, %v816
      %v903 = vpop.permute.xlu0 %902
      %906 = vset.pattern.permute.xlu0 0
      %907 = vperm.xlu0 %906, %v817
      %v908 = vpop.permute.xlu0 %907
      %911 = vset.pattern.permute.xlu0 0
      %912 = vperm.xlu0 %911, %v818
      %v913 = vpop.permute.xlu0 %912
      %916 = vset.pattern.permute.xlu0 0
      %917 = vperm.xlu0 %916, %v819
      %v918 = vpop.permute.xlu0 %917
      %921 = vset.pattern.permute.xlu0 0
      %922 = vperm.xlu0 %921, %v820
      %v923 = vpop.permute.xlu0 %922
      %926 = vset.pattern.permute.xlu0 0
      %927 = vperm.xlu0 %926, %v821
      %v928 = vpop.permute.xlu0 %927
      %931 = vset.pattern.permute.xlu0 0
      %932 = vperm.xlu0 %931, %v822
      %v933 = vpop.permute.xlu0 %932
      %936 = vset.pattern.permute.xlu0 0
      %937 = vperm.xlu0 %936, %v823
      %v938 = vpop.permute.xlu0 %937
      %941 = vset.pattern.permute.xlu0 0
      %942 = vperm.xlu0 %941, %v824
      %v943 = vpop.permute.xlu0 %942
      %946 = vset.pattern.permute.xlu0 0
      %947 = vperm.xlu0 %946, %v825
      %v948 = vpop.permute.xlu0 %947
      %951 = vset.pattern.permute.xlu0 0
      %952 = vperm.xlu0 %951, %v826
      %v953 = vpop.permute.xlu0 %952
      %956 = vset.pattern.permute.xlu0 0
      %957 = vperm.xlu0 %956, %v827
      %v958 = vpop.permute.xlu0 %957
      %961 = vset.pattern.permute.xlu0 0
      %962 = vperm.xlu0 %961, %v828
      %v963 = vpop.permute.xlu0 %962
      %966 = vset.pattern.permute.xlu0 0
      %967 = vperm.xlu0 %966, %v829
      %v968 = vpop.permute.xlu0 %967
      %971 = vset.pattern.permute.xlu0 0
      %972 = vperm.xlu0 %971, %v830
      %v973 = vpop.permute.xlu0 %972
      %976 = vset.pattern.permute.xlu0 0
      %977 = vperm.xlu0 %976, %v831
      %v978 = vpop.permute.xlu0 %977
      %981 = vset.pattern.permute.xlu0 0
      %982 = vperm.xlu0 %981, %v832
      %v983 = vpop.permute.xlu0 %982
      %986 = vset.pattern.permute.xlu0 0
      %987 = vperm.xlu0 %986, %v833
      %v988 = vpop.permute.xlu0 %987
      %991 = vset.pattern.permute.xlu0 0
      %992 = vperm.xlu0 %991, %v834
      %v993 = vpop.permute.xlu0 %992
      %996 = vset.pattern.permute.xlu0 0
      %997 = vperm.xlu0 %996, %v835
      %v998 = vpop.permute.xlu0 %997
      %1001 = vset.pattern.permute.xlu0 0
      %1002 = vperm.xlu0 %1001, %v836
      %v1003 = vpop.permute.xlu0 %1002
      %1006 = vset.pattern.permute.xlu0 0
      %1007 = vperm.xlu0 %1006, %v837
      %v1008 = vpop.permute.xlu0 %1007
      %1011 = vset.pattern.permute.xlu0 0
      %1012 = vperm.xlu0 %1011, %v838
      %v1013 = vpop.permute.xlu0 %1012
      %1016 = vset.pattern.permute.xlu0 0
      %1017 = vperm.xlu0 %1016, %v839
      %v1018 = vpop.permute.xlu0 %1017
      %1021 = vset.pattern.permute.xlu0 0
      %1022 = vperm.xlu0 %1021, %v840
      %v1023 = vpop.permute.xlu0 %1022
      %1026 = vset.pattern.permute.xlu0 0
      %1027 = vperm.xlu0 %1026, %v841
      %v1028 = vpop.permute.xlu0 %1027
      %1031 = vset.pattern.permute.xlu0 0
      %1032 = vperm.xlu0 %1031, %v842
      %v1033 = vpop.permute.xlu0 %1032
      %v1035 = vmul.f32 %v843, %v878
      %v1036 = vmul.f32 %v844, %v883
      %v1037 = vmul.f32 %v845, %v888
      %v1038 = vmul.f32 %v846, %v893
      %v1039 = vmul.f32 %v847, %v898
      %v1040 = vmul.f32 %v848, %v903
      %v1041 = vmul.f32 %v849, %v908
      %v1042 = vmul.f32 %v850, %v913
      %v1043 = vmul.f32 %v851, %v918
      %v1044 = vmul.f32 %v852, %v923
      %v1045 = vmul.f32 %v853, %v928
      %v1046 = vmul.f32 %v854, %v933
      %v1047 = vmul.f32 %v855, %v938
      %v1048 = vmul.f32 %v856, %v943
      %v1049 = vmul.f32 %v857, %v948
      %v1050 = vmul.f32 %v858, %v953
      %v1051 = vmul.f32 %v859, %v958
      %v1052 = vmul.f32 %v860, %v963
      %v1053 = vmul.f32 %v861, %v968
      %v1054 = vmul.f32 %v862, %v973
      %v1055 = vmul.f32 %v863, %v978
      %v1056 = vmul.f32 %v864, %v983
      %v1057 = vmul.f32 %v865, %v988
      %v1058 = vmul.f32 %v866, %v993
      %v1059 = vmul.f32 %v867, %v998
      %v1060 = vmul.f32 %v868, %v1003
      %v1061 = vmul.f32 %v869, %v1008
      %v1062 = vmul.f32 %v870, %v1013
      %v1063 = vmul.f32 %v871, %v1018
      %v1064 = vmul.f32 %v872, %v1023
      %v1065 = vmul.f32 %v873, %v1028
      %v1066 = vmul.f32 %v874, %v1033
      %v1067 = vsub.f32 %v1035, %v175
      %v1068 = vsub.f32 %v1036, %v176
      %v1069 = vsub.f32 %v1037, %v177
      %v1070 = vsub.f32 %v1038, %v178
      %v1071 = vsub.f32 %v1039, %v179
      %v1072 = vsub.f32 %v1040, %v180
      %v1073 = vsub.f32 %v1041, %v181
      %v1074 = vsub.f32 %v1042, %v182
      %v1075 = vsub.f32 %v1043, %v183
      %v1076 = vsub.f32 %v1044, %v184
      %v1077 = vsub.f32 %v1045, %v185
      %v1078 = vsub.f32 %v1046, %v186
      %v1079 = vsub.f32 %v1047, %v187
      %v1080 = vsub.f32 %v1048, %v188
      %v1081 = vsub.f32 %v1049, %v189
      %v1082 = vsub.f32 %v1050, %v190
      %v1083 = vsub.f32 %v1051, %v191
      %v1084 = vsub.f32 %v1052, %v192
      %v1085 = vsub.f32 %v1053, %v193
      %v1086 = vsub.f32 %v1054, %v194
      %v1087 = vsub.f32 %v1055, %v195
      %v1088 = vsub.f32 %v1056, %v196
      %v1089 = vsub.f32 %v1057, %v197
      %v1090 = vsub.f32 %v1058, %v198
      %v1091 = vsub.f32 %v1059, %v199
      %v1092 = vsub.f32 %v1060, %v200
      %v1093 = vsub.f32 %v1061, %v201
      %v1094 = vsub.f32 %v1062, %v202
      %v1095 = vsub.f32 %v1063, %v203
      %v1096 = vsub.f32 %v1064, %v204
      %v1097 = vsub.f32 %v1065, %v205
      %v1098 = vsub.f32 %v1066, %v206
      %1099 = vst.msk [vmem:[%s174] sm:$0xff] %vm472, %v1067
      %1100 = vst.msk [vmem:[%s174 + $0x8] sm:$0xff] %vm472, %v1068
      %1101 = vst.msk [vmem:[%s174 + $0x10] sm:$0xff] %vm472, %v1069
      %1102 = vst.msk [vmem:[%s174 + $0x18] sm:$0xff] %vm472, %v1070
      %1103 = vst.msk [vmem:[%s174 + $0x20] sm:$0xff] %vm472, %v1071
      %1104 = vst.msk [vmem:[%s174 + $0x28] sm:$0xff] %vm472, %v1072
      %1105 = vst.msk [vmem:[%s174 + $0x30] sm:$0xff] %vm472, %v1073
      %1106 = vst.msk [vmem:[%s174 + $0x38] sm:$0xff] %vm472, %v1074
      %1107 = vst.msk [vmem:[%s174 + $0x40] sm:$0xff] %vm472, %v1075
      %1108 = vst.msk [vmem:[%s174 + $0x48] sm:$0xff] %vm472, %v1076
      %1109 = vst.msk [vmem:[%s174 + $0x50] sm:$0xff] %vm472, %v1077
      %1110 = vst.msk [vmem:[%s174 + $0x58] sm:$0xff] %vm472, %v1078
      %1111 = vst.msk [vmem:[%s174 + $0x60] sm:$0xff] %vm472, %v1079
      %1112 = vst.msk [vmem:[%s174 + $0x68] sm:$0xff] %vm472, %v1080
      %1113 = vst.msk [vmem:[%s174 + $0x70] sm:$0xff] %vm472, %v1081
      %1114 = vst.msk [vmem:[%s174 + $0x78] sm:$0xff] %vm472, %v1082
      %1115 = vst.msk [vmem:[%s174 + $0x80] sm:$0xff] %vm472, %v1083
      %1116 = vst.msk [vmem:[%s174 + $0x88] sm:$0xff] %vm472, %v1084
      %1117 = vst.msk [vmem:[%s174 + $0x90] sm:$0xff] %vm472, %v1085
      %1118 = vst.msk [vmem:[%s174 + $0x98] sm:$0xff] %vm472, %v1086
      %1119 = vst.msk [vmem:[%s174 + $0xa0] sm:$0xff] %vm472, %v1087
      %1120 = vst.msk [vmem:[%s174 + $0xa8] sm:$0xff] %vm472, %v1088
      %1121 = vst.msk [vmem:[%s174 + $0xb0] sm:$0xff] %vm472, %v1089
      %1122 = vst.msk [vmem:[%s174 + $0xb8] sm:$0xff] %vm472, %v1090
      %1123 = vst.msk [vmem:[%s174 + $0xc0] sm:$0xff] %vm472, %v1091
      %1124 = vst.msk [vmem:[%s174 + $0xc8] sm:$0xff] %vm472, %v1092
      %1125 = vst.msk [vmem:[%s174 + $0xd0] sm:$0xff] %vm472, %v1093
      %1126 = vst.msk [vmem:[%s174 + $0xd8] sm:$0xff] %vm472, %v1094
      %1127 = vst.msk [vmem:[%s174 + $0xe0] sm:$0xff] %vm472, %v1095
      %1128 = vst.msk [vmem:[%s174 + $0xe8] sm:$0xff] %vm472, %v1096
      %1129 = vst.msk [vmem:[%s174 + $0xf0] sm:$0xff] %vm472, %v1097
      %1130 = vst.msk [vmem:[%s174 + $0xf8] sm:$0xff] %vm472, %v1098
      %p1131 = scmp.lt.s32.totalorder %s17, 1
      %s1132 = scalar_select %p1131, %s17, 1
      %p1133 = scmp.lt.s32.totalorder %s18, 0
      %s1134 = scalar_select %p1133, %s18, 0
      %s1135 = smul.addr %s1132, 32
      %s1136 = sadd.s32 %s1134, %s1135
      %s1137 = smul.addr %s1136, 8
      %s1138 = scalar_lea.vmem %s2, %s1137
      // Predicated region
      $region29: #{tpu_custom_call.1} parent=27 // pred_check
        %p1139 = pneg %p94
      $region30: #{tpu_custom_call.1} parent=27 // pred_check_branch
        %1141 = sbr.rel (%p1139) target = $region32
      $region31: #{tpu_custom_call.1} parent=27 // pred_region
        _
      $region32: #{tpu_custom_call.1} parent=27 // pred_fallthru
        _
    $region28: #{tpu_custom_call.1} parent=5 // pred_fallthru
      _
    %p1142 = scmp.le.s32.totalorder 2, %s8
    // Predicated region
    $region33: #{tpu_custom_call.1} parent=5 // pred_check
      %p1143 = pneg %p1142
    $region34: #{tpu_custom_call.1} parent=5 // pred_check_branch
      %1145 = sbr.rel (%p1143) target = $region36
    $region35: #{tpu_custom_call.1} parent=5 // pred_region
      %s1146 = ssub.s32 %s8, 2
      // Predicated region
      $region37: #{tpu_custom_call.1} parent=35 // pred_check
        %p1147 = pneg %p100
      $region38: #{tpu_custom_call.1} parent=35 // pred_check_branch
        %1149 = sbr.rel (%p1147) target = $region40
      $region39: #{tpu_custom_call.1} parent=35 // pred_region
        %p1150 = scmp.lt.s32.totalorder %s19, 1
        %s1151 = scalar_select %p1150, %s19, 1
        %p1152 = scmp.lt.s32.totalorder %s20, 0
        %s1153 = scalar_select %p1152, %s20, 0
        %s1154 = smul.addr %s1151, 32
        %s1155 = sadd.s32 %s1153, %s1154
        %s1156 = smul.addr %s1155, 8
        %s1157 = scalar_lea.vmem %s2, %s1156
      $region40: #{tpu_custom_call.1} parent=35 // pred_fallthru
        _
    $region36: #{tpu_custom_call.1} parent=5 // pred_fallthru
      _
  $region6: #{tpu_custom_call.1} parent=0 // loop_footer
    %s12 = sadd.s32 1, %s8
  $region7: #{tpu_custom_call.1} parent=0 // loop_footer_branch
    %7 = sbr.rel target = $region3
  $region8: #{tpu_custom_call.1} parent=0 // loop_exit
    _

</llo_original>
